<compile_context>
chip_gen: v5e
topology: v5e:2x2
jax: 0.10.0
libtpu: 0.0.40
codegen_flags: <defaults>
</compile_context>

<pallas_src>
import jax
import jax.numpy as jnp
from jax.experimental import pallas as pl
from jax.experimental.pallas import tpu as pltpu

# Feature counts of the PopulationODE MLP: 3 -> 4 -> tanh -> 4 -> tanh -> 3.
_D_IN, _D_H, _D_OUT = 3, 4, 3

# Default batch tile along the lane (last) axis; must be a multiple of 128.
_TILE_B = 8192


def _mlp_kernel(w1_ref, b1_ref, w2_ref, b2_ref, w3_ref, b3_ref, y_ref, o_ref):
    """One batch tile of the MLP, feature-major.

    y_ref: (3, TILE_B) VMEM; o_ref: (3, TILE_B) VMEM.
    Weights (in, out) and biases (out,) are SMEM refs read as scalars, so each
    layer is a fully unrolled scalar*vector multiply-add chain on the VPU.
    """
    y = y_ref[...]                                            # single dense (3, TILE_B) load
    rows = [y[i:i + 1, :] for i in range(_D_IN)]              # each (1, TILE_B)

    def layer(rows_in, w_ref, b_ref, n_in, n_out, activate):
        outs = []
        for j in range(n_out):
            acc = rows_in[0] * w_ref[0, j] + b_ref[j]
            for i in range(1, n_in):
                acc = acc + rows_in[i] * w_ref[i, j]
            outs.append(jnp.tanh(acc) if activate else acc)
        return outs

    h1 = layer(rows, w1_ref, b1_ref, _D_IN, _D_H, True)
    h2 = layer(h1, w2_ref, b2_ref, _D_H, _D_H, True)
    out = layer(h2, w3_ref, b3_ref, _D_H, _D_OUT, False)
    o_ref[...] = jnp.concatenate(out, axis=0)                 # lane-dense (3, TILE_B) store


def population_ode_forward(y, params, *, tile_b=_TILE_B):
    """y: (B, 3) float32 -> (B, 3) float32 (matches PyTorch PopulationODE.forward)."""
    if y.ndim != 2 or y.shape[1] != _D_IN:
        raise ValueError(f"expected (B, {_D_IN}) input, got {y.shape}")
    if tile_b % 128 != 0:
        raise ValueError("tile_b must be a multiple of 128")
    B = y.shape[0]

    # Shrink the tile for small batches (everything stays a multiple of 128).
    min_pad = pl.cdiv(max(B, 1), 128) * 128
    tb = min(tile_b, min_pad)

    # Feature-major (lane-dense) layout: batch on the last (lane) axis.
    yt = jnp.asarray(y, jnp.float32).T                        # (3, B)
    padded_b = pl.cdiv(B, tb) * tb
    if padded_b != B:
        yt = jnp.pad(yt, ((0, 0), (0, padded_b - B)))
    num_tiles = padded_b // tb

    smem_spec = pl.BlockSpec(memory_space=pltpu.MemorySpace.SMEM)
    in_spec = pl.BlockSpec((_D_IN, tb), lambda i: (0, i))
    out_spec = pl.BlockSpec((_D_OUT, tb), lambda i: (0, i))

    cost = pl.CostEstimate(
        flops=2 * (_D_IN * _D_H + _D_H * _D_H + _D_H * _D_OUT) * padded_b,
        transcendentals=2 * _D_H * padded_b,
        bytes_accessed=(_D_IN + _D_OUT) * 4 * padded_b,
    )

    out_t = pl.pallas_call(
        _mlp_kernel,
        out_shape=jax.ShapeDtypeStruct((_D_OUT, padded_b), jnp.float32),
        grid=(num_tiles,),
        in_specs=[smem_spec] * 6 + [in_spec],
        out_specs=out_spec,
        compiler_params=pltpu.CompilerParams(
            dimension_semantics=("parallel",),
            vmem_limit_bytes=32 * 1024 * 1024,
        ),
        cost_estimate=cost,
    )(
        params["w1"], params["b1"],
        params["w2"], params["b2"],
        params["w3"], params["b3"],
        yt,
    )
    return out_t[:, :B].T


def init_params(key):
    """Deterministic init mimicking PyTorch Linear's U(-1/sqrt(fan_in), 1/sqrt(fan_in)).

    Weights stored as (in_features, out_features) so y @ W + b matches
    nn.Linear's y @ W.T + b; biases stored 1-D (out_features,).
    """
    ks = jax.random.split(key, 6)

    def linear(kw, kb, fan_in, fan_out):
        bound = 1.0 / jnp.sqrt(fan_in)
        w = jax.random.uniform(kw, (fan_in, fan_out), jnp.float32, -bound, bound)
        b = jax.random.uniform(kb, (fan_out,), jnp.float32, -bound, bound)
        return w, b

    w1, b1 = linear(ks[0], ks[1], _D_IN, _D_H)
    w2, b2 = linear(ks[2], ks[3], _D_H, _D_H)
    w3, b3 = linear(ks[4], ks[5], _D_H, _D_OUT)
    return {"w1": w1, "b1": b1, "w2": w2, "b2": b2, "w3": w3, "b3": b3}


def _reference(y, p):
    h1 = jnp.tanh(y @ p["w1"] + p["b1"])
    h2 = jnp.tanh(h1 @ p["w2"] + p["b2"])
    return h2 @ p["w3"] + p["b3"]


if __name__ == "__main__":
    key = jax.random.PRNGKey(0)
    k_param, k_in = jax.random.split(key)

    params = init_params(k_param)
    y = jax.random.normal(k_in, (8, 3), dtype=jnp.float32)  # batch=8, state dim=3

    out = population_ode_forward(y, params)
    out = jax.block_until_ready(out)

    ref = _reference(y, params)
    assert out.shape == (8, 3)
    assert jnp.allclose(out, ref, atol=1e-5, rtol=1e-5)

    print("KERNEL_OK")
</pallas_src>

<mosaic_0001>
module attributes {stable_mosaic.version = 11 : i64} {
  func.func @_mlp_kernel(%arg0: i32, %arg1: memref<3x4xf32, #tpu.memory_space<smem>>, %arg2: memref<4xf32, #tpu.memory_space<smem>>, %arg3: memref<4x4xf32, #tpu.memory_space<smem>>, %arg4: memref<4xf32, #tpu.memory_space<smem>>, %arg5: memref<4x3xf32, #tpu.memory_space<smem>>, %arg6: memref<3xf32, #tpu.memory_space<smem>>, %arg7: memref<3x128xf32, #tpu.memory_space<vmem>>, %arg8: memref<3x128xf32, #tpu.memory_space<vmem>>) attributes {dimension_semantics = [#tpu.dimension_semantics<parallel>], iteration_bounds = array<i64: 1>, scalar_prefetch = 0 : i64, scratch_operands = 0 : i64, tpu.core_type = #tpu.core_type<tc>, window_params = [{transform_indices = @transform_0, window_bounds = array<i64: 3, 4>}, {transform_indices = @transform_1, window_bounds = array<i64: 4>}, {transform_indices = @transform_2, window_bounds = array<i64: 4, 4>}, {transform_indices = @transform_3, window_bounds = array<i64: 4>}, {transform_indices = @transform_4, window_bounds = array<i64: 4, 3>}, {transform_indices = @transform_5, window_bounds = array<i64: 3>}, {transform_indices = @transform_6, window_bounds = array<i64: 3, 128>}, {transform_indices = @transform_7, window_bounds = array<i64: 3, 128>}]} {
    %c0 = arith.constant 0 : index
    %c0_0 = arith.constant 0 : index
    %0 = vector.load %arg7[%c0, %c0_0] : memref<3x128xf32, #tpu.memory_space<vmem>>, vector<3x128xf32>
    %1 = vector.extract_strided_slice %0 {offsets = [0, 0], sizes = [1, 128], strides = [1, 1]} : vector<3x128xf32> to vector<1x128xf32>
    %2 = vector.extract_strided_slice %0 {offsets = [1, 0], sizes = [1, 128], strides = [1, 1]} : vector<3x128xf32> to vector<1x128xf32>
    %3 = vector.extract_strided_slice %0 {offsets = [2, 0], sizes = [1, 128], strides = [1, 1]} : vector<3x128xf32> to vector<1x128xf32>
    %c0_1 = arith.constant 0 : index
    %c0_2 = arith.constant 0 : index
    %4 = memref.load %arg1[%c0_1, %c0_2] : memref<3x4xf32, #tpu.memory_space<smem>>
    %5 = vector.broadcast %4 : f32 to vector<1x128xf32>
    %6 = arith.mulf %1, %5 : vector<1x128xf32>
    %c0_3 = arith.constant 0 : index
    %7 = memref.load %arg2[%c0_3] : memref<4xf32, #tpu.memory_space<smem>>
    %8 = vector.broadcast %7 : f32 to vector<1x128xf32>
    %9 = arith.addf %6, %8 : vector<1x128xf32>
    %c1 = arith.constant 1 : index
    %c0_4 = arith.constant 0 : index
    %10 = memref.load %arg1[%c1, %c0_4] : memref<3x4xf32, #tpu.memory_space<smem>>
    %11 = vector.broadcast %10 : f32 to vector<1x128xf32>
    %12 = arith.mulf %2, %11 : vector<1x128xf32>
    %13 = arith.addf %9, %12 : vector<1x128xf32>
    %c2 = arith.constant 2 : index
    %c0_5 = arith.constant 0 : index
    %14 = memref.load %arg1[%c2, %c0_5] : memref<3x4xf32, #tpu.memory_space<smem>>
    %15 = vector.broadcast %14 : f32 to vector<1x128xf32>
    %16 = arith.mulf %3, %15 : vector<1x128xf32>
    %17 = arith.addf %13, %16 : vector<1x128xf32>
    %18 = math.tanh %17 : vector<1x128xf32>
    %c0_6 = arith.constant 0 : index
    %c1_7 = arith.constant 1 : index
    %19 = memref.load %arg1[%c0_6, %c1_7] : memref<3x4xf32, #tpu.memory_space<smem>>
    %20 = vector.broadcast %19 : f32 to vector<1x128xf32>
    %21 = arith.mulf %1, %20 : vector<1x128xf32>
    %c1_8 = arith.constant 1 : index
    %22 = memref.load %arg2[%c1_8] : memref<4xf32, #tpu.memory_space<smem>>
    %23 = vector.broadcast %22 : f32 to vector<1x128xf32>
    %24 = arith.addf %21, %23 : vector<1x128xf32>
    %c1_9 = arith.constant 1 : index
    %c1_10 = arith.constant 1 : index
    %25 = memref.load %arg1[%c1_9, %c1_10] : memref<3x4xf32, #tpu.memory_space<smem>>
    %26 = vector.broadcast %25 : f32 to vector<1x128xf32>
    %27 = arith.mulf %2, %26 : vector<1x128xf32>
    %28 = arith.addf %24, %27 : vector<1x128xf32>
    %c2_11 = arith.constant 2 : index
    %c1_12 = arith.constant 1 : index
    %29 = memref.load %arg1[%c2_11, %c1_12] : memref<3x4xf32, #tpu.memory_space<smem>>
    %30 = vector.broadcast %29 : f32 to vector<1x128xf32>
    %31 = arith.mulf %3, %30 : vector<1x128xf32>
    %32 = arith.addf %28, %31 : vector<1x128xf32>
    %33 = math.tanh %32 : vector<1x128xf32>
    %c0_13 = arith.constant 0 : index
    %c2_14 = arith.constant 2 : index
    %34 = memref.load %arg1[%c0_13, %c2_14] : memref<3x4xf32, #tpu.memory_space<smem>>
    %35 = vector.broadcast %34 : f32 to vector<1x128xf32>
    %36 = arith.mulf %1, %35 : vector<1x128xf32>
    %c2_15 = arith.constant 2 : index
    %37 = memref.load %arg2[%c2_15] : memref<4xf32, #tpu.memory_space<smem>>
    %38 = vector.broadcast %37 : f32 to vector<1x128xf32>
    %39 = arith.addf %36, %38 : vector<1x128xf32>
    %c1_16 = arith.constant 1 : index
    %c2_17 = arith.constant 2 : index
    %40 = memref.load %arg1[%c1_16, %c2_17] : memref<3x4xf32, #tpu.memory_space<smem>>
    %41 = vector.broadcast %40 : f32 to vector<1x128xf32>
    %42 = arith.mulf %2, %41 : vector<1x128xf32>
    %43 = arith.addf %39, %42 : vector<1x128xf32>
    %c2_18 = arith.constant 2 : index
    %c2_19 = arith.constant 2 : index
    %44 = memref.load %arg1[%c2_18, %c2_19] : memref<3x4xf32, #tpu.memory_space<smem>>
    %45 = vector.broadcast %44 : f32 to vector<1x128xf32>
    %46 = arith.mulf %3, %45 : vector<1x128xf32>
    %47 = arith.addf %43, %46 : vector<1x128xf32>
    %48 = math.tanh %47 : vector<1x128xf32>
    %c0_20 = arith.constant 0 : index
    %c3 = arith.constant 3 : index
    %49 = memref.load %arg1[%c0_20, %c3] : memref<3x4xf32, #tpu.memory_space<smem>>
    %50 = vector.broadcast %49 : f32 to vector<1x128xf32>
    %51 = arith.mulf %1, %50 : vector<1x128xf32>
    %c3_21 = arith.constant 3 : index
    %52 = memref.load %arg2[%c3_21] : memref<4xf32, #tpu.memory_space<smem>>
    %53 = vector.broadcast %52 : f32 to vector<1x128xf32>
    %54 = arith.addf %51, %53 : vector<1x128xf32>
    %c1_22 = arith.constant 1 : index
    %c3_23 = arith.constant 3 : index
    %55 = memref.load %arg1[%c1_22, %c3_23] : memref<3x4xf32, #tpu.memory_space<smem>>
    %56 = vector.broadcast %55 : f32 to vector<1x128xf32>
    %57 = arith.mulf %2, %56 : vector<1x128xf32>
    %58 = arith.addf %54, %57 : vector<1x128xf32>
    %c2_24 = arith.constant 2 : index
    %c3_25 = arith.constant 3 : index
    %59 = memref.load %arg1[%c2_24, %c3_25] : memref<3x4xf32, #tpu.memory_space<smem>>
    %60 = vector.broadcast %59 : f32 to vector<1x128xf32>
    %61 = arith.mulf %3, %60 : vector<1x128xf32>
    %62 = arith.addf %58, %61 : vector<1x128xf32>
    %63 = math.tanh %62 : vector<1x128xf32>
    %c0_26 = arith.constant 0 : index
    %c0_27 = arith.constant 0 : index
    %64 = memref.load %arg3[%c0_26, %c0_27] : memref<4x4xf32, #tpu.memory_space<smem>>
    %65 = vector.broadcast %64 : f32 to vector<1x128xf32>
    %66 = arith.mulf %18, %65 : vector<1x128xf32>
    %c0_28 = arith.constant 0 : index
    %67 = memref.load %arg4[%c0_28] : memref<4xf32, #tpu.memory_space<smem>>
    %68 = vector.broadcast %67 : f32 to vector<1x128xf32>
    %69 = arith.addf %66, %68 : vector<1x128xf32>
    %c1_29 = arith.constant 1 : index
    %c0_30 = arith.constant 0 : index
    %70 = memref.load %arg3[%c1_29, %c0_30] : memref<4x4xf32, #tpu.memory_space<smem>>
    %71 = vector.broadcast %70 : f32 to vector<1x128xf32>
    %72 = arith.mulf %33, %71 : vector<1x128xf32>
    %73 = arith.addf %69, %72 : vector<1x128xf32>
    %c2_31 = arith.constant 2 : index
    %c0_32 = arith.constant 0 : index
    %74 = memref.load %arg3[%c2_31, %c0_32] : memref<4x4xf32, #tpu.memory_space<smem>>
    %75 = vector.broadcast %74 : f32 to vector<1x128xf32>
    %76 = arith.mulf %48, %75 : vector<1x128xf32>
    %77 = arith.addf %73, %76 : vector<1x128xf32>
    %c3_33 = arith.constant 3 : index
    %c0_34 = arith.constant 0 : index
    %78 = memref.load %arg3[%c3_33, %c0_34] : memref<4x4xf32, #tpu.memory_space<smem>>
    %79 = vector.broadcast %78 : f32 to vector<1x128xf32>
    %80 = arith.mulf %63, %79 : vector<1x128xf32>
    %81 = arith.addf %77, %80 : vector<1x128xf32>
    %82 = math.tanh %81 : vector<1x128xf32>
    %c0_35 = arith.constant 0 : index
    %c1_36 = arith.constant 1 : index
    %83 = memref.load %arg3[%c0_35, %c1_36] : memref<4x4xf32, #tpu.memory_space<smem>>
    %84 = vector.broadcast %83 : f32 to vector<1x128xf32>
    %85 = arith.mulf %18, %84 : vector<1x128xf32>
    %c1_37 = arith.constant 1 : index
    %86 = memref.load %arg4[%c1_37] : memref<4xf32, #tpu.memory_space<smem>>
    %87 = vector.broadcast %86 : f32 to vector<1x128xf32>
    %88 = arith.addf %85, %87 : vector<1x128xf32>
    %c1_38 = arith.constant 1 : index
    %c1_39 = arith.constant 1 : index
    %89 = memref.load %arg3[%c1_38, %c1_39] : memref<4x4xf32, #tpu.memory_space<smem>>
    %90 = vector.broadcast %89 : f32 to vector<1x128xf32>
    %91 = arith.mulf %33, %90 : vector<1x128xf32>
    %92 = arith.addf %88, %91 : vector<1x128xf32>
    %c2_40 = arith.constant 2 : index
    %c1_41 = arith.constant 1 : index
    %93 = memref.load %arg3[%c2_40, %c1_41] : memref<4x4xf32, #tpu.memory_space<smem>>
    %94 = vector.broadcast %93 : f32 to vector<1x128xf32>
    %95 = arith.mulf %48, %94 : vector<1x128xf32>
    %96 = arith.addf %92, %95 : vector<1x128xf32>
    %c3_42 = arith.constant 3 : index
    %c1_43 = arith.constant 1 : index
    %97 = memref.load %arg3[%c3_42, %c1_43] : memref<4x4xf32, #tpu.memory_space<smem>>
    %98 = vector.broadcast %97 : f32 to vector<1x128xf32>
    %99 = arith.mulf %63, %98 : vector<1x128xf32>
    %100 = arith.addf %96, %99 : vector<1x128xf32>
    %101 = math.tanh %100 : vector<1x128xf32>
    %c0_44 = arith.constant 0 : index
    %c2_45 = arith.constant 2 : index
    %102 = memref.load %arg3[%c0_44, %c2_45] : memref<4x4xf32, #tpu.memory_space<smem>>
    %103 = vector.broadcast %102 : f32 to vector<1x128xf32>
    %104 = arith.mulf %18, %103 : vector<1x128xf32>
    %c2_46 = arith.constant 2 : index
    %105 = memref.load %arg4[%c2_46] : memref<4xf32, #tpu.memory_space<smem>>
    %106 = vector.broadcast %105 : f32 to vector<1x128xf32>
    %107 = arith.addf %104, %106 : vector<1x128xf32>
    %c1_47 = arith.constant 1 : index
    %c2_48 = arith.constant 2 : index
    %108 = memref.load %arg3[%c1_47, %c2_48] : memref<4x4xf32, #tpu.memory_space<smem>>
    %109 = vector.broadcast %108 : f32 to vector<1x128xf32>
    %110 = arith.mulf %33, %109 : vector<1x128xf32>
    %111 = arith.addf %107, %110 : vector<1x128xf32>
    %c2_49 = arith.constant 2 : index
    %c2_50 = arith.constant 2 : index
    %112 = memref.load %arg3[%c2_49, %c2_50] : memref<4x4xf32, #tpu.memory_space<smem>>
    %113 = vector.broadcast %112 : f32 to vector<1x128xf32>
    %114 = arith.mulf %48, %113 : vector<1x128xf32>
    %115 = arith.addf %111, %114 : vector<1x128xf32>
    %c3_51 = arith.constant 3 : index
    %c2_52 = arith.constant 2 : index
    %116 = memref.load %arg3[%c3_51, %c2_52] : memref<4x4xf32, #tpu.memory_space<smem>>
    %117 = vector.broadcast %116 : f32 to vector<1x128xf32>
    %118 = arith.mulf %63, %117 : vector<1x128xf32>
    %119 = arith.addf %115, %118 : vector<1x128xf32>
    %120 = math.tanh %119 : vector<1x128xf32>
    %c0_53 = arith.constant 0 : index
    %c3_54 = arith.constant 3 : index
    %121 = memref.load %arg3[%c0_53, %c3_54] : memref<4x4xf32, #tpu.memory_space<smem>>
    %122 = vector.broadcast %121 : f32 to vector<1x128xf32>
    %123 = arith.mulf %18, %122 : vector<1x128xf32>
    %c3_55 = arith.constant 3 : index
    %124 = memref.load %arg4[%c3_55] : memref<4xf32, #tpu.memory_space<smem>>
    %125 = vector.broadcast %124 : f32 to vector<1x128xf32>
    %126 = arith.addf %123, %125 : vector<1x128xf32>
    %c1_56 = arith.constant 1 : index
    %c3_57 = arith.constant 3 : index
    %127 = memref.load %arg3[%c1_56, %c3_57] : memref<4x4xf32, #tpu.memory_space<smem>>
    %128 = vector.broadcast %127 : f32 to vector<1x128xf32>
    %129 = arith.mulf %33, %128 : vector<1x128xf32>
    %130 = arith.addf %126, %129 : vector<1x128xf32>
    %c2_58 = arith.constant 2 : index
    %c3_59 = arith.constant 3 : index
    %131 = memref.load %arg3[%c2_58, %c3_59] : memref<4x4xf32, #tpu.memory_space<smem>>
    %132 = vector.broadcast %131 : f32 to vector<1x128xf32>
    %133 = arith.mulf %48, %132 : vector<1x128xf32>
    %134 = arith.addf %130, %133 : vector<1x128xf32>
    %c3_60 = arith.constant 3 : index
    %c3_61 = arith.constant 3 : index
    %135 = memref.load %arg3[%c3_60, %c3_61] : memref<4x4xf32, #tpu.memory_space<smem>>
    %136 = vector.broadcast %135 : f32 to vector<1x128xf32>
    %137 = arith.mulf %63, %136 : vector<1x128xf32>
    %138 = arith.addf %134, %137 : vector<1x128xf32>
    %139 = math.tanh %138 : vector<1x128xf32>
    %c0_62 = arith.constant 0 : index
    %c0_63 = arith.constant 0 : index
    %140 = memref.load %arg5[%c0_62, %c0_63] : memref<4x3xf32, #tpu.memory_space<smem>>
    %141 = vector.broadcast %140 : f32 to vector<1x128xf32>
    %142 = arith.mulf %82, %141 : vector<1x128xf32>
    %c0_64 = arith.constant 0 : index
    %143 = memref.load %arg6[%c0_64] : memref<3xf32, #tpu.memory_space<smem>>
    %144 = vector.broadcast %143 : f32 to vector<1x128xf32>
    %145 = arith.addf %142, %144 : vector<1x128xf32>
    %c1_65 = arith.constant 1 : index
    %c0_66 = arith.constant 0 : index
    %146 = memref.load %arg5[%c1_65, %c0_66] : memref<4x3xf32, #tpu.memory_space<smem>>
    %147 = vector.broadcast %146 : f32 to vector<1x128xf32>
    %148 = arith.mulf %101, %147 : vector<1x128xf32>
    %149 = arith.addf %145, %148 : vector<1x128xf32>
    %c2_67 = arith.constant 2 : index
    %c0_68 = arith.constant 0 : index
    %150 = memref.load %arg5[%c2_67, %c0_68] : memref<4x3xf32, #tpu.memory_space<smem>>
    %151 = vector.broadcast %150 : f32 to vector<1x128xf32>
    %152 = arith.mulf %120, %151 : vector<1x128xf32>
    %153 = arith.addf %149, %152 : vector<1x128xf32>
    %c3_69 = arith.constant 3 : index
    %c0_70 = arith.constant 0 : index
    %154 = memref.load %arg5[%c3_69, %c0_70] : memref<4x3xf32, #tpu.memory_space<smem>>
    %155 = vector.broadcast %154 : f32 to vector<1x128xf32>
    %156 = arith.mulf %139, %155 : vector<1x128xf32>
    %157 = arith.addf %153, %156 : vector<1x128xf32>
    %c0_71 = arith.constant 0 : index
    %c1_72 = arith.constant 1 : index
    %158 = memref.load %arg5[%c0_71, %c1_72] : memref<4x3xf32, #tpu.memory_space<smem>>
    %159 = vector.broadcast %158 : f32 to vector<1x128xf32>
    %160 = arith.mulf %82, %159 : vector<1x128xf32>
    %c1_73 = arith.constant 1 : index
    %161 = memref.load %arg6[%c1_73] : memref<3xf32, #tpu.memory_space<smem>>
    %162 = vector.broadcast %161 : f32 to vector<1x128xf32>
    %163 = arith.addf %160, %162 : vector<1x128xf32>
    %c1_74 = arith.constant 1 : index
    %c1_75 = arith.constant 1 : index
    %164 = memref.load %arg5[%c1_74, %c1_75] : memref<4x3xf32, #tpu.memory_space<smem>>
    %165 = vector.broadcast %164 : f32 to vector<1x128xf32>
    %166 = arith.mulf %101, %165 : vector<1x128xf32>
    %167 = arith.addf %163, %166 : vector<1x128xf32>
    %c2_76 = arith.constant 2 : index
    %c1_77 = arith.constant 1 : index
    %168 = memref.load %arg5[%c2_76, %c1_77] : memref<4x3xf32, #tpu.memory_space<smem>>
    %169 = vector.broadcast %168 : f32 to vector<1x128xf32>
    %170 = arith.mulf %120, %169 : vector<1x128xf32>
    %171 = arith.addf %167, %170 : vector<1x128xf32>
    %c3_78 = arith.constant 3 : index
    %c1_79 = arith.constant 1 : index
    %172 = memref.load %arg5[%c3_78, %c1_79] : memref<4x3xf32, #tpu.memory_space<smem>>
    %173 = vector.broadcast %172 : f32 to vector<1x128xf32>
    %174 = arith.mulf %139, %173 : vector<1x128xf32>
    %175 = arith.addf %171, %174 : vector<1x128xf32>
    %c0_80 = arith.constant 0 : index
    %c2_81 = arith.constant 2 : index
    %176 = memref.load %arg5[%c0_80, %c2_81] : memref<4x3xf32, #tpu.memory_space<smem>>
    %177 = vector.broadcast %176 : f32 to vector<1x128xf32>
    %178 = arith.mulf %82, %177 : vector<1x128xf32>
    %c2_82 = arith.constant 2 : index
    %179 = memref.load %arg6[%c2_82] : memref<3xf32, #tpu.memory_space<smem>>
    %180 = vector.broadcast %179 : f32 to vector<1x128xf32>
    %181 = arith.addf %178, %180 : vector<1x128xf32>
    %c1_83 = arith.constant 1 : index
    %c2_84 = arith.constant 2 : index
    %182 = memref.load %arg5[%c1_83, %c2_84] : memref<4x3xf32, #tpu.memory_space<smem>>
    %183 = vector.broadcast %182 : f32 to vector<1x128xf32>
    %184 = arith.mulf %101, %183 : vector<1x128xf32>
    %185 = arith.addf %181, %184 : vector<1x128xf32>
    %c2_85 = arith.constant 2 : index
    %c2_86 = arith.constant 2 : index
    %186 = memref.load %arg5[%c2_85, %c2_86] : memref<4x3xf32, #tpu.memory_space<smem>>
    %187 = vector.broadcast %186 : f32 to vector<1x128xf32>
    %188 = arith.mulf %120, %187 : vector<1x128xf32>
    %189 = arith.addf %185, %188 : vector<1x128xf32>
    %c3_87 = arith.constant 3 : index
    %c2_88 = arith.constant 2 : index
    %190 = memref.load %arg5[%c3_87, %c2_88] : memref<4x3xf32, #tpu.memory_space<smem>>
    %191 = vector.broadcast %190 : f32 to vector<1x128xf32>
    %192 = arith.mulf %139, %191 : vector<1x128xf32>
    %193 = arith.addf %189, %192 : vector<1x128xf32>
    %194 = tpu.concatenate %157, %175, %193 in 0 : vector<1x128xf32>, vector<1x128xf32>, vector<1x128xf32> -> vector<3x128xf32>
    %c0_89 = arith.constant 0 : index
    %c0_90 = arith.constant 0 : index
    %195 = vector.load %arg8[%c0_89, %c0_90] : memref<3x128xf32, #tpu.memory_space<vmem>>, vector<3x128xf32>
    tpu.vector_store %arg8[%c0_89, %c0_90], %194 {strides = array<i32>} : memref<3x128xf32, #tpu.memory_space<vmem>>, vector<3x128xf32>,
    return
  }
  func.func @transform_0(%arg0: i32) -> (i32, i32) {
    %c0_i32 = arith.constant 0 : i32
    %c0_i32_0 = arith.constant 0 : i32
    %c0_i32_1 = arith.constant 0 : i32
    return %c0_i32, %c0_i32_0 : i32, i32
  }
  func.func @transform_1(%arg0: i32) -> i32 {
    %c0_i32 = arith.constant 0 : i32
    %c0_i32_0 = arith.constant 0 : i32
    return %c0_i32 : i32
  }
  func.func @transform_2(%arg0: i32) -> (i32, i32) {
    %c0_i32 = arith.constant 0 : i32
    %c0_i32_0 = arith.constant 0 : i32
    %c0_i32_1 = arith.constant 0 : i32
    return %c0_i32, %c0_i32_0 : i32, i32
  }
  func.func @transform_3(%arg0: i32) -> i32 {
    %c0_i32 = arith.constant 0 : i32
    %c0_i32_0 = arith.constant 0 : i32
    return %c0_i32 : i32
  }
  func.func @transform_4(%arg0: i32) -> (i32, i32) {
    %c0_i32 = arith.constant 0 : i32
    %c0_i32_0 = arith.constant 0 : i32
    %c0_i32_1 = arith.constant 0 : i32
    return %c0_i32, %c0_i32_0 : i32, i32
  }
  func.func @transform_5(%arg0: i32) -> i32 {
    %c0_i32 = arith.constant 0 : i32
    %c0_i32_0 = arith.constant 0 : i32
    return %c0_i32 : i32
  }
  func.func @transform_6(%arg0: i32) -> (i32, i32) {
    %c0_i32 = arith.constant 0 : i32
    %c0_i32_0 = arith.constant 0 : i32
    return %c0_i32, %arg0 : i32, i32
  }
  func.func @transform_7(%arg0: i32) -> (i32, i32) {
    %c0_i32 = arith.constant 0 : i32
    %c0_i32_0 = arith.constant 0 : i32
    return %c0_i32, %arg0 : i32, i32
  }
}

</mosaic_0001>

<llo_original>
// kernel: tpu_custom_call.1
$region0: #{tpu_custom_call.1}
  #allocation0 [shape = 'u32[]', space=smem, size = 0x4, offset = 0x4, fixed_abs, tag = 'smem constant byte address 0x4 - core index']
  #allocation1 [shape = 'u32[72,128]{1,0:T(1,128)}', space=vmem, size = 0x9000, scoped, tag = 'internal scratch']
  %s0 = inlined_call_operand.hbm [shape: f32[3,4], index: 0, kind: input, shape index: {}]
  %s1 = inlined_call_operand.hbm [shape: f32[4], index: 1, kind: input, shape index: {}]
  %s2 = inlined_call_operand.hbm [shape: f32[4,4], index: 2, kind: input, shape index: {}]
  %s3 = inlined_call_operand.vmem [shape: f32[4], index: 3, kind: input, shape index: {}]
  %s4 = inlined_call_operand.hbm [shape: f32[4,3], index: 4, kind: input, shape index: {}]
  %s5 = inlined_call_operand.hbm [shape: f32[3], index: 5, kind: input, shape index: {}]
  %s6 = inlined_call_operand.vmem [shape: f32[3,128], index: 6, kind: input, shape index: {}]
  %s7 = inlined_call_operand.hbm [shape: f32[3,128], index: 7, kind: output, shape index: {}]
  %s8 = sld [smem:[#allocation0]]
  $region62: #{tpu_custom_call.1} parent=0
    _
  %s10 = ssub.s32 1, %s8
  %s11 = scalar_select 0, %s10, %s8
  $region1: #{tpu_custom_call.1} parent=0
    #allocation2 [shape = 'u8[2048]{0}', space=smem, size = 0x800, scoped, tag = 'input window, operand 0, single buffered']
    #allocation3 [shape = 's32[1]{0}', space=sflag, size = 0x4, scoped, tag = 'scoped memory for tpu_custom_call.1']
    #allocation4 [shape = 's32[1]{0}', space=sflag, size = 0x4, scoped, tag = 'scoped memory for tpu_custom_call.1']
    #allocation5 [shape = 's32[1]{0}', space=sflag, size = 0x4, scoped, tag = 'scoped memory for tpu_custom_call.1']
    #allocation6 [shape = 'u8[512]{0}', space=smem, size = 0x200, scoped, tag = 'input window, operand 1, single buffered']
    #allocation7 [shape = 's32[1]{0}', space=sflag, size = 0x4, scoped, tag = 'scoped memory for tpu_custom_call.1']
    #allocation8 [shape = 'u8[2048]{0}', space=smem, size = 0x800, scoped, tag = 'input window, operand 2, single buffered']
    #allocation9 [shape = 'u8[512]{0}', space=smem, size = 0x200, scoped, tag = 'input window, operand 3, single buffered']
    #allocation10 [shape = 'u8[2048]{0}', space=smem, size = 0x800, scoped, tag = 'input window, operand 4, single buffered']
    #allocation11 [shape = 's32[1]{0}', space=sflag, size = 0x4, scoped, tag = 'scoped memory for tpu_custom_call.1']
    #allocation12 [shape = 'u8[512]{0}', space=smem, size = 0x200, scoped, tag = 'input window, operand 5, single buffered']
    #allocation13 [shape = 'u8[2048]{0}', space=vmem, size = 0x800, scoped, tag = 'output window, operand 0, single buffered']
    %12 = vsyncpa [#allocation4], 0
    %13 = vsyncpa [#allocation7], 0
    %14 = vsyncpa [#allocation5], 0
    %15 = vsyncpa [#allocation11], 0
    %16 = vsyncpa [#allocation3], 0
    // Predicated region
    $region2: #{tpu_custom_call.1} parent=1 // pred_check
      _
    $region3: #{tpu_custom_call.1} parent=1 // pred_check_branch
      %18 = sbr.rel (0) target = $region5
    $region4: #{tpu_custom_call.1} parent=1 // pred_region
      %20 = vsyncadd [#allocation4], 0
      %s22 = sshll.u32 %s0, 4
      %s23 = int_to_ptr.hbm [resolvable:$true] %s22
      %25 = dma.hbm_to_smem %s23, 64, [#allocation2], [#allocation4]
    $region5: #{tpu_custom_call.1} parent=1 // pred_fallthru
      _
    // Predicated region
    $region6: #{tpu_custom_call.1} parent=1 // pred_check
      _
    $region7: #{tpu_custom_call.1} parent=1 // pred_check_branch
      %27 = sbr.rel (0) target = $region9
    $region8: #{tpu_custom_call.1} parent=1 // pred_region
      %29 = vsyncadd [#allocation7], 0
      %s31 = sshll.u32 %s1, 4
      %s32 = int_to_ptr.hbm [resolvable:$true] %s31
      %34 = dma.hbm_to_smem %s32, 16, [#allocation6], [#allocation7]
    $region9: #{tpu_custom_call.1} parent=1 // pred_fallthru
      _
    // Predicated region
    $region10: #{tpu_custom_call.1} parent=1 // pred_check
      _
    $region11: #{tpu_custom_call.1} parent=1 // pred_check_branch
      %36 = sbr.rel (0) target = $region13
    $region12: #{tpu_custom_call.1} parent=1 // pred_region
      %38 = vsyncadd [#allocation7], 0
      %s40 = sshll.u32 %s2, 4
      %s41 = int_to_ptr.hbm [resolvable:$true] %s40
      %43 = dma.hbm_to_smem %s41, 64, [#allocation8], [#allocation7]
    $region13: #{tpu_custom_call.1} parent=1 // pred_fallthru
      _
    // Predicated region
    $region14: #{tpu_custom_call.1} parent=1 // pred_check
      _
    $region15: #{tpu_custom_call.1} parent=1 // pred_check_branch
      %45 = sbr.rel (0) target = $region17
    $region16: #{tpu_custom_call.1} parent=1 // pred_region
      %47 = vsyncadd [#allocation5], 0
      %s49 = sshll.u32 %s3, 4
      %s50 = int_to_ptr.vmem [resolvable:$true] %s49
      %52 = dma.vmem_to_smem %s50, 16, [#allocation9], [#allocation5]
    $region17: #{tpu_custom_call.1} parent=1 // pred_fallthru
      _
    // Predicated region
    $region18: #{tpu_custom_call.1} parent=1 // pred_check
      _
    $region19: #{tpu_custom_call.1} parent=1 // pred_check_branch
      %54 = sbr.rel (0) target = $region21
    $region20: #{tpu_custom_call.1} parent=1 // pred_region
      %56 = vsyncadd [#allocation11], 0
      %s58 = sshll.u32 %s4, 4
      %s59 = int_to_ptr.hbm [resolvable:$true] %s58
      %61 = dma.hbm_to_smem %s59, 64, [#allocation10], [#allocation11]
    $region21: #{tpu_custom_call.1} parent=1 // pred_fallthru
      _
    // Predicated region
    $region22: #{tpu_custom_call.1} parent=1 // pred_check
      _
    $region23: #{tpu_custom_call.1} parent=1 // pred_check_branch
      %63 = sbr.rel (0) target = $region25
    $region24: #{tpu_custom_call.1} parent=1 // pred_region
      %65 = vsyncadd [#allocation11], 0
      %s67 = sshll.u32 %s5, 4
      %s68 = int_to_ptr.hbm [resolvable:$true] %s67
      %70 = dma.hbm_to_smem %s68, 16, [#allocation12], [#allocation11]
    $region25: #{tpu_custom_call.1} parent=1 // pred_fallthru
      _
    // Predicated region
    $region26: #{tpu_custom_call.1} parent=1 // pred_check
      _
    $region27: #{tpu_custom_call.1} parent=1 // pred_check_branch
      %72 = sbr.rel (0) target = $region29
    $region28: #{tpu_custom_call.1} parent=1 // pred_region
      _
    $region29: #{tpu_custom_call.1} parent=1 // pred_fallthru
      _
    // Predicated region
    $region30: #{tpu_custom_call.1} parent=1 // pred_check
      _
    $region31: #{tpu_custom_call.1} parent=1 // pred_check_branch
      %74 = sbr.rel (0) target = $region33
    $region32: #{tpu_custom_call.1} parent=1 // pred_region
      %76 = dma.done [#allocation4], 64
    $region33: #{tpu_custom_call.1} parent=1 // pred_fallthru
      _
    // Predicated region
    $region34: #{tpu_custom_call.1} parent=1 // pred_check
      _
    $region35: #{tpu_custom_call.1} parent=1 // pred_check_branch
      %78 = sbr.rel (0) target = $region37
    $region36: #{tpu_custom_call.1} parent=1 // pred_region
      %80 = dma.done [#allocation7], 16
    $region37: #{tpu_custom_call.1} parent=1 // pred_fallthru
      _
    // Predicated region
    $region38: #{tpu_custom_call.1} parent=1 // pred_check
      _
    $region39: #{tpu_custom_call.1} parent=1 // pred_check_branch
      %82 = sbr.rel (0) target = $region41
    $region40: #{tpu_custom_call.1} parent=1 // pred_region
      %84 = dma.done [#allocation7], 64
    $region41: #{tpu_custom_call.1} parent=1 // pred_fallthru
      _
    // Predicated region
    $region42: #{tpu_custom_call.1} parent=1 // pred_check
      _
    $region43: #{tpu_custom_call.1} parent=1 // pred_check_branch
      %86 = sbr.rel (0) target = $region45
    $region44: #{tpu_custom_call.1} parent=1 // pred_region
      %88 = dma.done [#allocation5], 16
    $region45: #{tpu_custom_call.1} parent=1 // pred_fallthru
      _
    // Predicated region
    $region46: #{tpu_custom_call.1} parent=1 // pred_check
      _
    $region47: #{tpu_custom_call.1} parent=1 // pred_check_branch
      %90 = sbr.rel (0) target = $region49
    $region48: #{tpu_custom_call.1} parent=1 // pred_region
      %92 = dma.done [#allocation11], 64
    $region49: #{tpu_custom_call.1} parent=1 // pred_fallthru
      _
    // Predicated region
    $region50: #{tpu_custom_call.1} parent=1 // pred_check
      _
    $region51: #{tpu_custom_call.1} parent=1 // pred_check_branch
      %94 = sbr.rel (0) target = $region53
    $region52: #{tpu_custom_call.1} parent=1 // pred_region
      %96 = dma.done [#allocation11], 16
    $region53: #{tpu_custom_call.1} parent=1 // pred_fallthru
      _
    %97 = sfence
    %v98 = vld [vmem:[%s6] sm:$0x7]
    %s99 = sld [smem:[#allocation2]]
    %v100 = vstv %s99
    %v101 = vmul.f32 %v98, %v100
    %s102 = sld [smem:[#allocation6]]
    %v103 = vstv %s102
    %v104 = vadd.f32 %v101, %v103
    %s105 = sld [smem:[#allocation2 + $0x80]]
    %v106 = vstv %s105
    %v107 = vmul.f32 %v98, %v106
    %v109 = vrot.slane %v107, 1
    %v111 = vadd.f32 %v104, %v109
    %s112 = sld [smem:[#allocation2 + $0x100]]
    %v113 = vstv %s112
    %v114 = vmul.f32 %v98, %v113
    %v116 = vrot.slane %v114, 2
    %v118 = vadd.f32 %v111, %v116
    %v119 = vtanh.pop %v118
    %s120 = sld [smem:[#allocation2 + $0x1]]
    %v121 = vstv %s120
    %v122 = vmul.f32 %v98, %v121
    %s123 = sld [smem:[#allocation6 + $0x1]]
    %v124 = vstv %s123
    %v125 = vadd.f32 %v122, %v124
    %s126 = sld [smem:[#allocation2 + $0x81]]
    %v127 = vstv %s126
    %v128 = vmul.f32 %v98, %v127
    %v130 = vrot.slane %v128, 1
    %v132 = vadd.f32 %v125, %v130
    %s133 = sld [smem:[#allocation2 + $0x101]]
    %v134 = vstv %s133
    %v135 = vmul.f32 %v98, %v134
    %v137 = vrot.slane %v135, 2
    %v139 = vadd.f32 %v132, %v137
    %v140 = vtanh.pop %v139
    %s141 = sld [smem:[#allocation2 + $0x2]]
    %v142 = vstv %s141
    %v143 = vmul.f32 %v98, %v142
    %s144 = sld [smem:[#allocation6 + $0x2]]
    %v145 = vstv %s144
    %v146 = vadd.f32 %v143, %v145
    %s147 = sld [smem:[#allocation2 + $0x82]]
    %v148 = vstv %s147
    %v149 = vmul.f32 %v98, %v148
    %v151 = vrot.slane %v149, 1
    %v153 = vadd.f32 %v146, %v151
    %s154 = sld [smem:[#allocation2 + $0x102]]
    %v155 = vstv %s154
    %v156 = vmul.f32 %v98, %v155
    %v158 = vrot.slane %v156, 2
    %v160 = vadd.f32 %v153, %v158
    %v161 = vtanh.pop %v160
    %s162 = sld [smem:[#allocation2 + $0x3]]
    %v163 = vstv %s162
    %v164 = vmul.f32 %v98, %v163
    %s165 = sld [smem:[#allocation6 + $0x3]]
    %v166 = vstv %s165
    %v167 = vadd.f32 %v164, %v166
    %s168 = sld [smem:[#allocation2 + $0x83]]
    %v169 = vstv %s168
    %v170 = vmul.f32 %v98, %v169
    %v172 = vrot.slane %v170, 1
    %v174 = vadd.f32 %v167, %v172
    %s175 = sld [smem:[#allocation2 + $0x103]]
    %v176 = vstv %s175
    %v177 = vmul.f32 %v98, %v176
    %v179 = vrot.slane %v177, 2
    %v181 = vadd.f32 %v174, %v179
    %v182 = vtanh.pop %v181
    %s183 = sld [smem:[#allocation8]]
    %v184 = vstv %s183
    %v185 = vmul.f32 %v119, %v184
    %s186 = sld [smem:[#allocation9]]
    %v187 = vstv %s186
    %v188 = vadd.f32 %v185, %v187
    %s189 = sld [smem:[#allocation8 + $0x80]]
    %v190 = vstv %s189
    %v191 = vmul.f32 %v140, %v190
    %v192 = vadd.f32 %v188, %v191
    %s193 = sld [smem:[#allocation8 + $0x100]]
    %v194 = vstv %s193
    %v195 = vmul.f32 %v161, %v194
    %v196 = vadd.f32 %v192, %v195
    %s197 = sld [smem:[#allocation8 + $0x180]]
    %v198 = vstv %s197
    %v199 = vmul.f32 %v182, %v198
    %v200 = vadd.f32 %v196, %v199
    %v201 = vtanh.pop %v200
    %s202 = sld [smem:[#allocation8 + $0x1]]
    %v203 = vstv %s202
    %v204 = vmul.f32 %v119, %v203
    %s205 = sld [smem:[#allocation9 + $0x1]]
    %v206 = vstv %s205
    %v207 = vadd.f32 %v204, %v206
    %s208 = sld [smem:[#allocation8 + $0x81]]
    %v209 = vstv %s208
    %v210 = vmul.f32 %v140, %v209
    %v211 = vadd.f32 %v207, %v210
    %s212 = sld [smem:[#allocation8 + $0x101]]
    %v213 = vstv %s212
    %v214 = vmul.f32 %v161, %v213
    %v215 = vadd.f32 %v211, %v214
    %s216 = sld [smem:[#allocation8 + $0x181]]
    %v217 = vstv %s216
    %v218 = vmul.f32 %v182, %v217
    %v219 = vadd.f32 %v215, %v218
    %v220 = vtanh.pop %v219
    %s221 = sld [smem:[#allocation8 + $0x2]]
    %v222 = vstv %s221
    %v223 = vmul.f32 %v119, %v222
    %s224 = sld [smem:[#allocation9 + $0x2]]
    %v225 = vstv %s224
    %v226 = vadd.f32 %v223, %v225
    %s227 = sld [smem:[#allocation8 + $0x82]]
    %v228 = vstv %s227
    %v229 = vmul.f32 %v140, %v228
    %v230 = vadd.f32 %v226, %v229
    %s231 = sld [smem:[#allocation8 + $0x102]]
    %v232 = vstv %s231
    %v233 = vmul.f32 %v161, %v232
    %v234 = vadd.f32 %v230, %v233
    %s235 = sld [smem:[#allocation8 + $0x182]]
    %v236 = vstv %s235
    %v237 = vmul.f32 %v182, %v236
    %v238 = vadd.f32 %v234, %v237
    %v239 = vtanh.pop %v238
    %s240 = sld [smem:[#allocation8 + $0x3]]
    %v241 = vstv %s240
    %v242 = vmul.f32 %v119, %v241
    %s243 = sld [smem:[#allocation9 + $0x3]]
    %v244 = vstv %s243
    %v245 = vadd.f32 %v242, %v244
    %s246 = sld [smem:[#allocation8 + $0x83]]
    %v247 = vstv %s246
    %v248 = vmul.f32 %v140, %v247
    %v249 = vadd.f32 %v245, %v248
    %s250 = sld [smem:[#allocation8 + $0x103]]
    %v251 = vstv %s250
    %v252 = vmul.f32 %v161, %v251
    %v253 = vadd.f32 %v249, %v252
    %s254 = sld [smem:[#allocation8 + $0x183]]
    %v255 = vstv %s254
    %v256 = vmul.f32 %v182, %v255
    %v257 = vadd.f32 %v253, %v256
    %v258 = vtanh.pop %v257
    %s259 = sld [smem:[#allocation10]]
    %v260 = vstv %s259
    %v261 = vmul.f32 %v201, %v260
    %s262 = sld [smem:[#allocation12]]
    %v263 = vstv %s262
    %v264 = vadd.f32 %v261, %v263
    %s265 = sld [smem:[#allocation10 + $0x80]]
    %v266 = vstv %s265
    %v267 = vmul.f32 %v220, %v266
    %v268 = vadd.f32 %v264, %v267
    %s269 = sld [smem:[#allocation10 + $0x100]]
    %v270 = vstv %s269
    %v271 = vmul.f32 %v239, %v270
    %v272 = vadd.f32 %v268, %v271
    %s273 = sld [smem:[#allocation10 + $0x180]]
    %v274 = vstv %s273
    %v275 = vmul.f32 %v258, %v274
    %v276 = vadd.f32 %v272, %v275
    %s277 = sld [smem:[#allocation10 + $0x1]]
    %v278 = vstv %s277
    %v279 = vmul.f32 %v201, %v278
    %s280 = sld [smem:[#allocation12 + $0x1]]
    %v281 = vstv %s280
    %v282 = vadd.f32 %v279, %v281
    %s283 = sld [smem:[#allocation10 + $0x81]]
    %v284 = vstv %s283
    %v285 = vmul.f32 %v220, %v284
    %v286 = vadd.f32 %v282, %v285
    %s287 = sld [smem:[#allocation10 + $0x101]]
    %v288 = vstv %s287
    %v289 = vmul.f32 %v239, %v288
    %v290 = vadd.f32 %v286, %v289
    %s291 = sld [smem:[#allocation10 + $0x181]]
    %v292 = vstv %s291
    %v293 = vmul.f32 %v258, %v292
    %v294 = vadd.f32 %v290, %v293
    %s295 = sld [smem:[#allocation10 + $0x2]]
    %v296 = vstv %s295
    %v297 = vmul.f32 %v201, %v296
    %s298 = sld [smem:[#allocation12 + $0x2]]
    %v299 = vstv %s298
    %v300 = vadd.f32 %v297, %v299
    %s301 = sld [smem:[#allocation10 + $0x82]]
    %v302 = vstv %s301
    %v303 = vmul.f32 %v220, %v302
    %v304 = vadd.f32 %v300, %v303
    %s305 = sld [smem:[#allocation10 + $0x102]]
    %v306 = vstv %s305
    %v307 = vmul.f32 %v239, %v306
    %v308 = vadd.f32 %v304, %v307
    %s309 = sld [smem:[#allocation10 + $0x182]]
    %v310 = vstv %s309
    %v311 = vmul.f32 %v258, %v310
    %v312 = vadd.f32 %v308, %v311
    %v314 = vrot.slane %v294, 7
    %v317 = vrot.slane %v312, 6
    %vm319 = vcmask 1040384
    %v320 = vsel %vm319, %v276, %v314
    %vm321 = vcmask 1041408
    %v322 = vsel %vm321, %v320, %v317
    %323 = vst [vmem:[#allocation13] sm:$0x7] %v322
    // Predicated region
    $region54: #{tpu_custom_call.1} parent=1 // pred_check
      _
    $region55: #{tpu_custom_call.1} parent=1 // pred_check_branch
      %325 = sbr.rel (0) target = $region57
    $region56: #{tpu_custom_call.1} parent=1 // pred_region
      %327 = vsyncadd [#allocation3], 0
      %s329 = sshll.u32 [#allocation13], 4
      %s330 = int_to_ptr.vmem [resolvable:$true] %s329
      %s331 = sshll.u32 %s7, 4
      %s332 = int_to_ptr.hbm [resolvable:$true] %s331
      %334 = dma.vmem_to_hbm [thread:$0]  %s330, 64, %s332, [#allocation3]
    $region57: #{tpu_custom_call.1} parent=1 // pred_fallthru
      _
    // Predicated region
    $region58: #{tpu_custom_call.1} parent=1 // pred_check
      _
    $region59: #{tpu_custom_call.1} parent=1 // pred_check_branch
      %336 = sbr.rel (0) target = $region61
    $region60: #{tpu_custom_call.1} parent=1 // pred_region
      %338 = dma.done [#allocation3], 64
    $region61: #{tpu_custom_call.1} parent=1 // pred_fallthru
      _
    %339 = vsyncpa [#allocation3], 1
    %340 = vsyncpa [#allocation4], 1
    %341 = vsyncpa [#allocation7], 1
    %342 = vsyncpa [#allocation11], 1
    %343 = vsyncpa [#allocation5], 1

</llo_original>
